<compile_context>
chip_gen: v6e
topology: v6e:2x2x1
jax: 0.10.0
libtpu: 0.0.40
codegen_flags: <defaults>
</compile_context>

<pallas_src>
import jax
import jax.numpy as jnp
from jax.experimental import pallas as pl
from jax.experimental.pallas import tpu as pltpu


def _round_up(n, m):
    return ((n + m - 1) // m) * m


# ---------------- Pallas kernel: AttentionPooling + final dense ----------------
def news_pool_kernel(x_ref, w1_ref, b1_ref, w2_ref, b2_ref, wd_ref, bd_ref, out_ref):
    TB, L, H = x_ref.shape

    x = x_ref[...].astype(jnp.float32)                 # (TB, L, H)
    x2d = x.reshape(TB * L, H)                          # leading-dim merge (lane dim unchanged)

    # att_fc1 + tanh: single batched MXU matmul per grid step.
    e = jnp.tanh(
        jnp.dot(x2d, w1_ref[...], preferred_element_type=jnp.float32)   # (TB*L, Qp)
        + b1_ref[...]
    )

    # att_fc2: lane-reduce over Qp (padded cols of w2 are zero).
    e3 = e.reshape(TB, L, -1)                            # (TB, L, Qp) leading-dim split
    b2 = b2_ref[0, 0]
    logits = jnp.sum(e3 * w2_ref[...], axis=-1, keepdims=True) + b2      # (TB, L, 1)

    # exp / normalize (attn_mask is None in NewsEncoder.forward).
    alpha = jnp.exp(logits)
    alpha = alpha / (jnp.sum(alpha, axis=1, keepdims=True) + 1e-8)        # (TB, L, 1)

    # weighted sum over tokens (VPU multiply + XLU reduce; MXU stays free).
    pooled = jnp.sum(x * alpha, axis=1)                                   # (TB, H)

    # final dense, batched over the TB rows of this tile.
    news = (
        jnp.dot(pooled, wd_ref[...], preferred_element_type=jnp.float32)  # (TB, Dp)
        + bd_ref[...]
    )
    out_ref[...] = news.astype(out_ref.dtype)


def attention_pool_and_dense(word_vecs, params, *, block_b=8):
    """word_vecs: (B, L, H) f32 -> (B, D) f32 via a single Pallas kernel."""
    B, L, H = word_vecs.shape
    Q = params["w1"].shape[1]
    D = params["wd"].shape[1]
    Qp = _round_up(Q, 128)
    Dp = _round_up(D, 128)

    # Lane-dense zero-padding of the (tiny) weight matrices; padded columns are
    # zero so results are unchanged, output sliced back to D below.
    w1 = jnp.pad(params["w1"], ((0, 0), (0, Qp - Q)))
    b1 = jnp.pad(params["b1"], ((0, 0), (0, Qp - Q)))
    w2 = jnp.pad(params["w2"], ((0, 0), (0, Qp - Q)))
    wd = jnp.pad(params["wd"], ((0, 0), (0, Dp - D)))
    bd = jnp.pad(params["bd"], ((0, 0), (0, Dp - D)))
    b2 = params["b2"].reshape(1, 1).astype(jnp.float32)

    # Batch tiling: TB rows per sequential grid step; keep >=2 steps so the
    # "parallel" axis can shard across TensorCores on multi-TC chips.
    TB = max(1, min(block_b, B))
    Bp = _round_up(B, TB)

    x = word_vecs.astype(jnp.bfloat16)          # bf16 for the dominant HBM stream
    if Bp != B:
        x = jnp.pad(x, ((0, Bp - B), (0, 0), (0, 0)))

    full = lambda i: (0, 0)
    out = pl.pallas_call(
        news_pool_kernel,
        out_shape=jax.ShapeDtypeStruct((Bp, Dp), jnp.float32),
        grid_spec=pltpu.PrefetchScalarGridSpec(
            num_scalar_prefetch=0,
            grid=(Bp // TB,),
            in_specs=[
                pl.BlockSpec((TB, L, H), lambda i: (i, 0, 0)),          # word_vecs tile
                pl.BlockSpec((H, Qp), full),                             # att_fc1 W
                pl.BlockSpec((1, Qp), full),                             # att_fc1 b
                pl.BlockSpec((1, Qp), full),                             # att_fc2 W (row)
                pl.BlockSpec(memory_space=pltpu.MemorySpace.SMEM),       # att_fc2 b (scalar)
                pl.BlockSpec((H, Dp), full),                             # dense W
                pl.BlockSpec((1, Dp), full),                             # dense b
            ],
            out_specs=pl.BlockSpec((TB, Dp), lambda i: (i, 0)),
        ),
        compiler_params=pltpu.CompilerParams(
            dimension_semantics=("parallel",),
        ),
    )(x, w1, b1, w2, b2, wd, bd)

    return out[:B, :D]


# ---------------- glue: synthetic "BERT" + full NewsEncoder forward ----------------
def init_params(key, vocab_size, hidden_size, query_dim, news_dim):
    ks = jax.random.split(key, 6)
    s = 0.02
    return {
        "emb": jax.random.normal(ks[0], (vocab_size, hidden_size), jnp.float32) * s,
        "w1": jax.random.normal(ks[1], (hidden_size, query_dim), jnp.float32) * s,
        "b1": jax.random.normal(ks[2], (1, query_dim), jnp.float32) * s,
        "w2": jax.random.normal(ks[3], (1, query_dim), jnp.float32) * s,
        "b2": jnp.zeros((1, 1), jnp.float32),
        "wd": jax.random.normal(ks[4], (hidden_size, news_dim), jnp.float32) * s,
        "bd": jax.random.normal(ks[5], (1, news_dim), jnp.float32) * s,
    }


def news_encoder_forward(x, params, num_words, *, block_b=8):
    """x: (B, 2*num_words) int32 -> (B, news_dim) f32."""
    text_ids = x[:, :num_words]                    # torch.narrow(x, 1, 0, num_words)
    text_attmask = x[:, num_words:2 * num_words]   # unused downstream (attn_mask=None)
    del text_attmask
    # TODO(synk): pretrained BERT replaced by deterministic embedding lookup.
    word_vecs = params["emb"][text_ids]            # (B, L, H) plain-JAX glue
    return attention_pool_and_dense(word_vecs, params, block_b=block_b)


# ---------------- pure-JAX reference for sanity ----------------
def reference_forward(x, params, num_words):
    ids = x[:, :num_words]
    # Match the kernel's bf16 activation storage so the comparison is apples-to-apples.
    wv = params["emb"][ids].astype(jnp.bfloat16).astype(jnp.float32)      # (B, L, H)
    e = jnp.tanh(wv @ params["w1"] + params["b1"])                        # (B, L, Q)
    alpha = jnp.exp(jnp.sum(e * params["w2"], -1, keepdims=True) + params["b2"])
    alpha = alpha / (jnp.sum(alpha, axis=1, keepdims=True) + 1e-8)
    pooled = jnp.sum(wv * alpha, axis=1)                                  # (B, H)
    return pooled @ params["wd"] + params["bd"]                           # (B, D)


if __name__ == "__main__":
    B, L = 16, 8           # batch, word_num
    H, Q, D = 32, 16, 24   # bert hidden, news_query_vector_dim, news_dim
    VOCAB = 64

    key = jax.random.PRNGKey(0)
    k_par, k_ids = jax.random.split(key)
    params = init_params(k_par, VOCAB, H, Q, D)

    text_ids = jax.random.randint(k_ids, (B, L), 0, VOCAB, dtype=jnp.int32)
    text_mask = jnp.ones((B, L), dtype=jnp.int32)
    x = jnp.concatenate([text_ids, text_mask], axis=1)        # (B, 2*L)

    out = news_encoder_forward(x, params, L, block_b=8)       # grid = (2,) batch tiles
    out = jax.block_until_ready(out)

    ref = reference_forward(x, params, L)
    assert out.shape == (B, D)
    assert jnp.allclose(out, ref, atol=1e-4, rtol=1e-4), "mismatch vs reference"
    print("KERNEL_OK")
</pallas_src>

<mosaic_0001>
module attributes {stable_mosaic.version = 11 : i64} {
  func.func @news_pool_kernel(%arg0: i32, %arg1: memref<8x8x32xbf16, #tpu.memory_space<vmem>>, %arg2: memref<32x128xf32, #tpu.memory_space<vmem>>, %arg3: memref<1x128xf32, #tpu.memory_space<vmem>>, %arg4: memref<1x128xf32, #tpu.memory_space<vmem>>, %arg5: memref<1x1xf32, #tpu.memory_space<smem>>, %arg6: memref<32x128xf32, #tpu.memory_space<vmem>>, %arg7: memref<1x128xf32, #tpu.memory_space<vmem>>, %arg8: memref<8x128xf32, #tpu.memory_space<vmem>>) attributes {dimension_semantics = [#tpu.dimension_semantics<parallel>], iteration_bounds = array<i64: 2>, scalar_prefetch = 0 : i64, scratch_operands = 0 : i64, tpu.core_type = #tpu.core_type<tc>, window_params = [{transform_indices = @transform_0, window_bounds = array<i64: 8, 8, 32>}, {pipeline_mode = #tpu.pipeline_mode<synchronous>, transform_indices = @transform_1, window_bounds = array<i64: 32, 128>}, {pipeline_mode = #tpu.pipeline_mode<synchronous>, transform_indices = @transform_2, window_bounds = array<i64: 1, 128>}, {pipeline_mode = #tpu.pipeline_mode<synchronous>, transform_indices = @transform_3, window_bounds = array<i64: 1, 128>}, {transform_indices = @transform_4, window_bounds = array<i64: 1, 1>}, {pipeline_mode = #tpu.pipeline_mode<synchronous>, transform_indices = @transform_5, window_bounds = array<i64: 32, 128>}, {pipeline_mode = #tpu.pipeline_mode<synchronous>, transform_indices = @transform_6, window_bounds = array<i64: 1, 128>}, {transform_indices = @transform_7, window_bounds = array<i64: 8, 128>}]} {
    %c0 = arith.constant 0 : index
    %c0_0 = arith.constant 0 : index
    %c0_1 = arith.constant 0 : index
    %0 = vector.load %arg1[%c0, %c0_0, %c0_1] : memref<8x8x32xbf16, #tpu.memory_space<vmem>>, vector<8x8x32xbf16>
    %1 = arith.extf %0 : vector<8x8x32xbf16> to vector<8x8x32xf32>
    %2 = vector.shape_cast %1 : vector<8x8x32xf32> to vector<64x32xf32>
    %c0_2 = arith.constant 0 : index
    %c0_3 = arith.constant 0 : index
    %3 = vector.load %arg2[%c0_2, %c0_3] : memref<32x128xf32, #tpu.memory_space<vmem>>, vector<32x128xf32>
    %cst = arith.constant dense<0.000000e+00> : vector<64x128xf32>
    %4 = tpu.matmul %2, %3, %cst {dimension_numbers = #tpu.dot_dimension_numbers<[1], [0], [0], [1], [0, 0, 1, 1], [], []>} : vector<64x32xf32>, vector<32x128xf32>, vector<64x128xf32> -> vector<64x128xf32>
    %c0_4 = arith.constant 0 : index
    %c0_5 = arith.constant 0 : index
    %5 = vector.load %arg3[%c0_4, %c0_5] : memref<1x128xf32, #tpu.memory_space<vmem>>, vector<1x128xf32>
    %6 = vector.broadcast %5 : vector<1x128xf32> to vector<64x128xf32>
    %7 = arith.addf %4, %6 : vector<64x128xf32>
    %8 = math.tanh %7 : vector<64x128xf32>
    %9 = vector.shape_cast %8 : vector<64x128xf32> to vector<8x8x128xf32>
    %c0_6 = arith.constant 0 : index
    %c0_7 = arith.constant 0 : index
    %10 = memref.load %arg5[%c0_6, %c0_7] : memref<1x1xf32, #tpu.memory_space<smem>>
    %c0_8 = arith.constant 0 : index
    %c0_9 = arith.constant 0 : index
    %11 = vector.load %arg4[%c0_8, %c0_9] : memref<1x128xf32, #tpu.memory_space<vmem>>, vector<1x128xf32>
    %12 = vector.shape_cast %11 : vector<1x128xf32> to vector<1x1x128xf32>
    %13 = vector.broadcast %12 : vector<1x1x128xf32> to vector<8x8x128xf32>
    %14 = arith.mulf %9, %13 : vector<8x8x128xf32>
    %cst_10 = arith.constant dense<0.000000e+00> : vector<8x8xf32>
    %15 = vector.multi_reduction <add>, %14, %cst_10 [2] : vector<8x8x128xf32> to vector<8x8xf32>
    %16 = vector.shape_cast %15 : vector<8x8xf32> to vector<8x8x1xf32>
    %17 = vector.broadcast %10 : f32 to vector<8x8x1xf32>
    %18 = arith.addf %16, %17 : vector<8x8x1xf32>
    %19 = math.exp %18 : vector<8x8x1xf32>
    %cst_11 = arith.constant dense<0.000000e+00> : vector<8x1xf32>
    %20 = vector.multi_reduction <add>, %19, %cst_11 [1] : vector<8x8x1xf32> to vector<8x1xf32>
    %21 = vector.shape_cast %20 : vector<8x1xf32> to vector<8x1x1xf32>
    %cst_12 = arith.constant 9.99999993E-9 : f32
    %22 = vector.broadcast %cst_12 : f32 to vector<8x1x1xf32>
    %23 = arith.addf %21, %22 : vector<8x1x1xf32>
    %24 = vector.broadcast %23 : vector<8x1x1xf32> to vector<8x8x1xf32>
    %25 = arith.divf %19, %24 : vector<8x8x1xf32>
    %26 = vector.broadcast %25 : vector<8x8x1xf32> to vector<8x8x32xf32>
    %27 = arith.mulf %1, %26 : vector<8x8x32xf32>
    %cst_13 = arith.constant dense<0.000000e+00> : vector<8x32xf32>
    %28 = vector.multi_reduction <add>, %27, %cst_13 [1] : vector<8x8x32xf32> to vector<8x32xf32>
    %c0_14 = arith.constant 0 : index
    %c0_15 = arith.constant 0 : index
    %29 = vector.load %arg6[%c0_14, %c0_15] : memref<32x128xf32, #tpu.memory_space<vmem>>, vector<32x128xf32>
    %cst_16 = arith.constant dense<0.000000e+00> : vector<8x128xf32>
    %30 = tpu.matmul %28, %29, %cst_16 {dimension_numbers = #tpu.dot_dimension_numbers<[1], [0], [0], [1], [0, 0, 1, 1], [], []>} : vector<8x32xf32>, vector<32x128xf32>, vector<8x128xf32> -> vector<8x128xf32>
    %c0_17 = arith.constant 0 : index
    %c0_18 = arith.constant 0 : index
    %31 = vector.load %arg7[%c0_17, %c0_18] : memref<1x128xf32, #tpu.memory_space<vmem>>, vector<1x128xf32>
    %32 = vector.broadcast %31 : vector<1x128xf32> to vector<8x128xf32>
    %33 = arith.addf %30, %32 : vector<8x128xf32>
    %c0_19 = arith.constant 0 : index
    %c0_20 = arith.constant 0 : index
    %34 = vector.load %arg8[%c0_19, %c0_20] : memref<8x128xf32, #tpu.memory_space<vmem>>, vector<8x128xf32>
    tpu.vector_store %arg8[%c0_19, %c0_20], %33 {strides = array<i32>} : memref<8x128xf32, #tpu.memory_space<vmem>>, vector<8x128xf32>,
    return
  }
  func.func @transform_0(%arg0: i32) -> (i32, i32, i32) {
    %c0_i32 = arith.constant 0 : i32
    %c0_i32_0 = arith.constant 0 : i32
    %c0_i32_1 = arith.constant 0 : i32
    return %arg0, %c0_i32, %c0_i32_0 : i32, i32, i32
  }
  func.func @transform_1(%arg0: i32) -> (i32, i32) {
    %c0_i32 = arith.constant 0 : i32
    %c0_i32_0 = arith.constant 0 : i32
    %c0_i32_1 = arith.constant 0 : i32
    return %c0_i32, %c0_i32_0 : i32, i32
  }
  func.func @transform_2(%arg0: i32) -> (i32, i32) {
    %c0_i32 = arith.constant 0 : i32
    %c0_i32_0 = arith.constant 0 : i32
    %c0_i32_1 = arith.constant 0 : i32
    return %c0_i32, %c0_i32_0 : i32, i32
  }
  func.func @transform_3(%arg0: i32) -> (i32, i32) {
    %c0_i32 = arith.constant 0 : i32
    %c0_i32_0 = arith.constant 0 : i32
    %c0_i32_1 = arith.constant 0 : i32
    return %c0_i32, %c0_i32_0 : i32, i32
  }
  func.func @transform_4(%arg0: i32) -> (i32, i32) {
    %c0_i32 = arith.constant 0 : i32
    %c0_i32_0 = arith.constant 0 : i32
    %c0_i32_1 = arith.constant 0 : i32
    return %c0_i32, %c0_i32_0 : i32, i32
  }
  func.func @transform_5(%arg0: i32) -> (i32, i32) {
    %c0_i32 = arith.constant 0 : i32
    %c0_i32_0 = arith.constant 0 : i32
    %c0_i32_1 = arith.constant 0 : i32
    return %c0_i32, %c0_i32_0 : i32, i32
  }
  func.func @transform_6(%arg0: i32) -> (i32, i32) {
    %c0_i32 = arith.constant 0 : i32
    %c0_i32_0 = arith.constant 0 : i32
    %c0_i32_1 = arith.constant 0 : i32
    return %c0_i32, %c0_i32_0 : i32, i32
  }
  func.func @transform_7(%arg0: i32) -> (i32, i32) {
    %c0_i32 = arith.constant 0 : i32
    %c0_i32_0 = arith.constant 0 : i32
    return %arg0, %c0_i32 : i32, i32
  }
}

</mosaic_0001>

<llo_original>
// kernel: tpu_custom_call.1
$region0: #{tpu_custom_call.1}
  #allocation0 [shape = 'u32[]', space=smem, size = 0x4, offset = 0x4, fixed_abs, tag = 'smem constant byte address 0x4 - core index']
  #allocation1 [shape = 'u32[144,128]{1,0:T(1,128)}', space=vmem, size = 0x12000, scoped, tag = 'internal scratch']
  #allocation2 [shape = 'f32[1,1]{1,0:T(1,128)S(6)}', space=smem, size = 0x200, scoped, tag = 'scoped memory for tpu_custom_call.1']
  %s0 = inlined_call_operand.hbm [shape: bf16[16,8,32], index: 0, kind: input, shape index: {}]
  %s1 = inlined_call_operand.hbm [shape: f32[32,128], index: 1, kind: input, shape index: {}]
  %s2 = inlined_call_operand.vmem [shape: f32[1,128], index: 2, kind: input, shape index: {}]
  %s3 = inlined_call_operand.vmem [shape: f32[1,128], index: 3, kind: input, shape index: {}]
  %s4 = inlined_call_operand.<no memory space> [shape: f32[1,1], index: 4, kind: input, shape index: {}]
  %s5 = inlined_call_operand.hbm [shape: f32[32,128], index: 5, kind: input, shape index: {}]
  %s6 = inlined_call_operand.vmem [shape: f32[1,128], index: 6, kind: input, shape index: {}]
  %s7 = inlined_call_operand.hbm [shape: f32[16,128], index: 7, kind: output, shape index: {}]
  %s8 = sld [smem:[#allocation0]]
  $region73: #{tpu_custom_call.1} parent=0
    _
  %s10 = ssub.s32 1, %s8
  %s11 = scalar_select 0, %s10, %s8
  %12 = sst [smem:[#allocation2]] %s4
  $region1: #{tpu_custom_call.1} parent=0
    #allocation3 [shape = 'u8[32768]{0}', space=vmem, size = 0x8000, scoped, tag = 'input window, operand 0']
    #allocation4 [shape = 's32[2]{0}', space=sflag, size = 0x8, scoped, tag = 'scoped memory for tpu_custom_call.1']
    #allocation5 [shape = 's32[2]{0}', space=sflag, size = 0x8, scoped, tag = 'scoped memory for tpu_custom_call.1']
    #allocation6 [shape = 'u8[16384]{0}', space=vmem, size = 0x4000, scoped, tag = 'input window, operand 1, single buffered']
    #allocation7 [shape = 's32[1]{0}', space=sflag, size = 0x4, scoped, tag = 'scoped memory for tpu_custom_call.1']
    #allocation8 [shape = 'u8[16384]{0}', space=vmem, size = 0x4000, scoped, tag = 'input window, operand 5, single buffered']
    #allocation9 [shape = 'u8[8192]{0}', space=vmem, size = 0x2000, scoped, tag = 'output window, operand 0']
    %13 = vsyncpa [#allocation4], 0
    %s14 = scalar_lea.sflag [#allocation4], 1
    %15 = vsyncpa %s14, 0
    %16 = vsyncpa [#allocation7], 0
    %17 = vsyncpa [#allocation5], 0
    %s18 = scalar_lea.sflag [#allocation5], 1
    %19 = vsyncpa %s18, 0
    loop: start=0, step=1, limit=4
    $region2: #{tpu_custom_call.1} parent=1 // loop_pre_header
      _
    $region3: #{tpu_custom_call.1} parent=1 // loop_header
      %s21 = sphi 0, %s25
      %p22 = scmp.ge.s32.totalorder %s21, 4
      %s31 = sphi 0, %s33
      %s34 = sphi 0, %s31
      %s35 = sphi 0, %s34
      %s51 = sphi 0, %s35
      %s55 = sphi 0, %s55
      %s57 = sphi 0, %s55
      %s58 = sphi 0, %s57
      %s72 = sphi 0, %s58
      %s76 = sphi 0, %s76
      %s78 = sphi 0, %s76
      %s79 = sphi 0, %s78
      %s93 = sphi 0, %s79
      %s97 = sphi 0, %s97
      %s99 = sphi 0, %s97
      %s100 = sphi 0, %s99
      %s114 = sphi 0, %s100
      %s118 = sphi 0, %s118
      %s120 = sphi 0, %s118
      %s121 = sphi 0, %s120
      %s135 = sphi 0, %s121
      %s139 = sphi 0, %s139
      %s141 = sphi 0, %s139
      %s142 = sphi 0, %s141
      %s156 = sphi 0, %s142
      %s160 = sphi 0, %s160
      %s162 = sphi 0, %s160
      %s163 = sphi 0, %s162
      %s177 = sphi 0, %s163
      %s183 = sphi 0, %s185
      %s186 = sphi 0, %s183
      %s187 = sphi 0, %s186
      %s203 = sphi 0, %s187
    $region4: #{tpu_custom_call.1} parent=1 // loop_header_branch
      %24 = sbr.rel (%p22) target = $region8
    $region5: #{tpu_custom_call.1} parent=1 // loop_body
      %s26 = ssub.s32 %s21, 1
      %s27 = ssub.s32 %s21, 2
      %s28 = sadd.s32 %s21, 1
      %s29 = ssub.s32 %s21, %s28
      %p30 = scmp.eq.s32.totalorder %s29, 0
      %s32 = sadd.s32 %s31, 1
      %s33 = scalar_select %p30, %s31, %s32
      %p36 = pneg %p30
      %p37 = scmp.eq.s32.totalorder %s21, 1
      %p38 = por %p36, %p37
      %p39 = scmp.ne.s32.totalorder %s31, %s34
      %p40 = scmp.eq.s32.totalorder %s21, 0
      %p41 = por %p39, %p40
      %p42 = scmp.ne.s32.totalorder %s31, %s34
      %p43 = scmp.eq.s32.totalorder %s26, 1
      %p44 = por %p42, %p43
      %p45 = scmp.ne.s32.totalorder %s34, %s35
      %p46 = scmp.eq.s32.totalorder %s26, 0
      %p47 = por %p45, %p46
      %p48 = scmp.ne.s32.totalorder %s34, %s35
      %p49 = scmp.eq.s32.totalorder %s27, 1
      %p50 = por %p48, %p49
      %p52 = scmp.ne.s32.totalorder %s35, %s51
      %p53 = scmp.eq.s32.totalorder %s27, 0
      %p54 = por %p52, %p53
      %s56 = sadd.s32 %s55, 1
      %p59 = scmp.eq.s32.totalorder %s21, 1
      %p60 = scmp.ne.s32.totalorder %s55, %s57
      %p61 = scmp.eq.s32.totalorder %s21, 0
      %p62 = por %p60, %p61
      %p63 = scmp.ne.s32.totalorder %s55, %s57
      %p64 = scmp.eq.s32.totalorder %s26, 1
      %p65 = por %p63, %p64
      %p66 = scmp.ne.s32.totalorder %s57, %s58
      %p67 = scmp.eq.s32.totalorder %s26, 0
      %p68 = por %p66, %p67
      %p69 = scmp.ne.s32.totalorder %s57, %s58
      %p70 = scmp.eq.s32.totalorder %s27, 1
      %p71 = por %p69, %p70
      %p73 = scmp.ne.s32.totalorder %s58, %s72
      %p74 = scmp.eq.s32.totalorder %s27, 0
      %p75 = por %p73, %p74
      %s77 = sadd.s32 %s76, 1
      %p80 = scmp.eq.s32.totalorder %s21, 1
      %p81 = scmp.ne.s32.totalorder %s76, %s78
      %p82 = scmp.eq.s32.totalorder %s21, 0
      %p83 = por %p81, %p82
      %p84 = scmp.ne.s32.totalorder %s76, %s78
      %p85 = scmp.eq.s32.totalorder %s26, 1
      %p86 = por %p84, %p85
      %p87 = scmp.ne.s32.totalorder %s78, %s79
      %p88 = scmp.eq.s32.totalorder %s26, 0
      %p89 = por %p87, %p88
      %p90 = scmp.ne.s32.totalorder %s78, %s79
      %p91 = scmp.eq.s32.totalorder %s27, 1
      %p92 = por %p90, %p91
      %p94 = scmp.ne.s32.totalorder %s79, %s93
      %p95 = scmp.eq.s32.totalorder %s27, 0
      %p96 = por %p94, %p95
      %s98 = sadd.s32 %s97, 1
      %p101 = scmp.eq.s32.totalorder %s21, 1
      %p102 = scmp.ne.s32.totalorder %s97, %s99
      %p103 = scmp.eq.s32.totalorder %s21, 0
      %p104 = por %p102, %p103
      %p105 = scmp.ne.s32.totalorder %s97, %s99
      %p106 = scmp.eq.s32.totalorder %s26, 1
      %p107 = por %p105, %p106
      %p108 = scmp.ne.s32.totalorder %s99, %s100
      %p109 = scmp.eq.s32.totalorder %s26, 0
      %p110 = por %p108, %p109
      %p111 = scmp.ne.s32.totalorder %s99, %s100
      %p112 = scmp.eq.s32.totalorder %s27, 1
      %p113 = por %p111, %p112
      %p115 = scmp.ne.s32.totalorder %s100, %s114
      %p116 = scmp.eq.s32.totalorder %s27, 0
      %p117 = por %p115, %p116
      %s119 = sadd.s32 %s118, 1
      %p122 = scmp.eq.s32.totalorder %s21, 1
      %p123 = scmp.ne.s32.totalorder %s118, %s120
      %p124 = scmp.eq.s32.totalorder %s21, 0
      %p125 = por %p123, %p124
      %p126 = scmp.ne.s32.totalorder %s118, %s120
      %p127 = scmp.eq.s32.totalorder %s26, 1
      %p128 = por %p126, %p127
      %p129 = scmp.ne.s32.totalorder %s120, %s121
      %p130 = scmp.eq.s32.totalorder %s26, 0
      %p131 = por %p129, %p130
      %p132 = scmp.ne.s32.totalorder %s120, %s121
      %p133 = scmp.eq.s32.totalorder %s27, 1
      %p134 = por %p132, %p133
      %p136 = scmp.ne.s32.totalorder %s121, %s135
      %p137 = scmp.eq.s32.totalorder %s27, 0
      %p138 = por %p136, %p137
      %s140 = sadd.s32 %s139, 1
      %p143 = scmp.eq.s32.totalorder %s21, 1
      %p144 = scmp.ne.s32.totalorder %s139, %s141
      %p145 = scmp.eq.s32.totalorder %s21, 0
      %p146 = por %p144, %p145
      %p147 = scmp.ne.s32.totalorder %s139, %s141
      %p148 = scmp.eq.s32.totalorder %s26, 1
      %p149 = por %p147, %p148
      %p150 = scmp.ne.s32.totalorder %s141, %s142
      %p151 = scmp.eq.s32.totalorder %s26, 0
      %p152 = por %p150, %p151
      %p153 = scmp.ne.s32.totalorder %s141, %s142
      %p154 = scmp.eq.s32.totalorder %s27, 1
      %p155 = por %p153, %p154
      %p157 = scmp.ne.s32.totalorder %s142, %s156
      %p158 = scmp.eq.s32.totalorder %s27, 0
      %p159 = por %p157, %p158
      %s161 = sadd.s32 %s160, 1
      %p164 = scmp.eq.s32.totalorder %s21, 1
      %p165 = scmp.ne.s32.totalorder %s160, %s162
      %p166 = scmp.eq.s32.totalorder %s21, 0
      %p167 = por %p165, %p166
      %p168 = scmp.ne.s32.totalorder %s160, %s162
      %p169 = scmp.eq.s32.totalorder %s26, 1
      %p170 = por %p168, %p169
      %p171 = scmp.ne.s32.totalorder %s162, %s163
      %p172 = scmp.eq.s32.totalorder %s26, 0
      %p173 = por %p171, %p172
      %p174 = scmp.ne.s32.totalorder %s162, %s163
      %p175 = scmp.eq.s32.totalorder %s27, 1
      %p176 = por %p174, %p175
      %p178 = scmp.ne.s32.totalorder %s163, %s177
      %p179 = scmp.eq.s32.totalorder %s27, 0
      %p180 = por %p178, %p179
      %s181 = ssub.s32 %s21, %s28
      %p182 = scmp.eq.s32.totalorder %s181, 0
      %s184 = sadd.s32 %s183, 1
      %s185 = scalar_select %p182, %s183, %s184
      %p188 = pneg %p182
      %p189 = scmp.eq.s32.totalorder %s21, 1
      %p190 = por %p188, %p189
      %p191 = scmp.ne.s32.totalorder %s183, %s186
      %p192 = scmp.eq.s32.totalorder %s21, 0
      %p193 = por %p191, %p192
      %p194 = scmp.ne.s32.totalorder %s183, %s186
      %p195 = scmp.eq.s32.totalorder %s26, 1
      %p196 = por %p194, %p195
      %p197 = scmp.ne.s32.totalorder %s186, %s187
      %p198 = scmp.eq.s32.totalorder %s26, 0
      %p199 = por %p197, %p198
      %p200 = scmp.ne.s32.totalorder %s186, %s187
      %p201 = scmp.eq.s32.totalorder %s27, 1
      %p202 = por %p200, %p201
      %p204 = scmp.ne.s32.totalorder %s187, %s203
      %p205 = scmp.eq.s32.totalorder %s27, 0
      %p206 = por %p204, %p205
      %p207 = scmp.le.s32.totalorder 1, %s21
      %p208 = scmp.lt.s32.totalorder %s21, 3
      %p209 = pnand %p207, %p208
      %p210 = pneg %p209
      // Predicated region
      $region9: #{tpu_custom_call.1} parent=5 // pred_check
        _
      $region10: #{tpu_custom_call.1} parent=5 // pred_check_branch
        %212 = sbr.rel (%p209) target = $region12
      $region11: #{tpu_custom_call.1} parent=5 // pred_region
        %s213 = ssub.s32 %s21, 1
        // Predicated region
        $region13: #{tpu_custom_call.1} parent=11 // pred_check
          %p214 = pneg %p68
        $region14: #{tpu_custom_call.1} parent=11 // pred_check_branch
          %216 = sbr.rel (%p214) target = $region16
        $region15: #{tpu_custom_call.1} parent=11 // pred_region
          %s218 = ssub.s32 512, 512
          %219 = vsyncadd [#allocation7], %s218
          %s220 = sshll.u32 [#allocation6], 4
          %s221 = int_to_ptr.vmem [resolvable:$true] %s220
          %226 = dma.hbm_to_vmem [thread:$0]  %s1, 512, %s221, [#allocation7], 128, 128, 8
        $region16: #{tpu_custom_call.1} parent=11 // pred_fallthru
          _
        // Predicated region
        $region17: #{tpu_custom_call.1} parent=11 // pred_check
          %p227 = pneg %p89
        $region18: #{tpu_custom_call.1} parent=11 // pred_check_branch
          %229 = sbr.rel (%p227) target = $region20
        $region19: #{tpu_custom_call.1} parent=11 // pred_region
          _
        $region20: #{tpu_custom_call.1} parent=11 // pred_fallthru
          _
        // Predicated region
        $region21: #{tpu_custom_call.1} parent=11 // pred_check
          %p230 = pneg %p110
        $region22: #{tpu_custom_call.1} parent=11 // pred_check_branch
          %232 = sbr.rel (%p230) target = $region24
        $region23: #{tpu_custom_call.1} parent=11 // pred_region
          _
        $region24: #{tpu_custom_call.1} parent=11 // pred_fallthru
          _
        // Predicated region
        $region25: #{tpu_custom_call.1} parent=11 // pred_check
          %p233 = pneg %p131
        $region26: #{tpu_custom_call.1} parent=11 // pred_check_branch
          %235 = sbr.rel (%p233) target = $region28
        $region27: #{tpu_custom_call.1} parent=11 // pred_region
          _
        $region28: #{tpu_custom_call.1} parent=11 // pred_fallthru
          _
        // Predicated region
        $region29: #{tpu_custom_call.1} parent=11 // pred_check
          %p236 = pneg %p152
        $region30: #{tpu_custom_call.1} parent=11 // pred_check_branch
          %238 = sbr.rel (%p236) target = $region32
        $region31: #{tpu_custom_call.1} parent=11 // pred_region
          %s240 = ssub.s32 512, 512
          %241 = vsyncadd [#allocation7], %s240
          %s242 = sshll.u32 [#allocation8], 4
          %s243 = int_to_ptr.vmem [resolvable:$true] %s242
          %248 = dma.hbm_to_vmem [thread:$0]  %s5, 512, %s243, [#allocation7], 128, 128, 8
        $region32: #{tpu_custom_call.1} parent=11 // pred_fallthru
          _
        // Predicated region
        $region33: #{tpu_custom_call.1} parent=11 // pred_check
          %p249 = pneg %p173
        $region34: #{tpu_custom_call.1} parent=11 // pred_check_branch
          %251 = sbr.rel (%p249) target = $region36
        $region35: #{tpu_custom_call.1} parent=11 // pred_region
          _
        $region36: #{tpu_custom_call.1} parent=11 // pred_fallthru
          _
      $region12: #{tpu_custom_call.1} parent=5 // pred_fallthru
        _
      %p252 = scmp.lt.s32.totalorder %s21, 2
      // Predicated region
      $region37: #{tpu_custom_call.1} parent=5 // pred_check
        %p253 = pneg %p252
      $region38: #{tpu_custom_call.1} parent=5 // pred_check_branch
        %255 = sbr.rel (%p253) target = $region40
      $region39: #{tpu_custom_call.1} parent=5 // pred_region
        // Predicated region
        $region41: #{tpu_custom_call.1} parent=39 // pred_check
          %p256 = pneg %p41
        $region42: #{tpu_custom_call.1} parent=39 // pred_check_branch
          %258 = sbr.rel (%p256) target = $region44
        $region43: #{tpu_custom_call.1} parent=39 // pred_region
          %s259 = sand.u32 %s31, 1
          %s260 = scalar_lea.sflag [#allocation4], %s259
          %s261 = sand.u32 %s31, 1
          %s262 = smul.addr %s261, 32
          %s263 = scalar_lea.vmem [#allocation3], %s262
          %s264 = smul.u32 8, %s21
          %s266 = ssub.s32 512, 512
          %267 = vsyncadd %s260, %s266
          %s268 = smul.addr %s264, 64
          %s269 = scalar_lea.hbm %s0, %s268
          %s270 = sshll.u32 %s263, 4
          %s271 = int_to_ptr.vmem [resolvable:$true] %s270
          %276 = dma.hbm_to_vmem [thread:$0]  %s269, 512, %s271, %s260, 64, 64, 4
        $region44: #{tpu_custom_call.1} parent=39 // pred_fallthru
          _
      $region40: #{tpu_custom_call.1} parent=5 // pred_fallthru
        _
      %p277 = scmp.le.s32.totalorder 1, %s21
      %p278 = scmp.lt.s32.totalorder %s21, 3
      %p279 = pnand %p277, %p278
      %p280 = pneg %p279
      // Predicated region
      $region45: #{tpu_custom_call.1} parent=5 // pred_check
        _
      $region46: #{tpu_custom_call.1} parent=5 // pred_check_branch
        %282 = sbr.rel (%p279) target = $region48
      $region47: #{tpu_custom_call.1} parent=5 // pred_region
        %s283 = ssub.s32 %s21, 1
        %s284 = sand.u32 %s34, 1
        %s285 = scalar_lea.sflag [#allocation4], %s284
        %s286 = sand.u32 %s34, 1
        %s287 = smul.addr %s286, 32
        %s288 = scalar_lea.vmem [#allocation3], %s287
        // Predicated region
        $region49: #{tpu_custom_call.1} parent=47 // pred_check
          %p289 = pneg %p47
        $region50: #{tpu_custom_call.1} parent=47 // pred_check_branch
          %291 = sbr.rel (%p289) target = $region52
        $region51: #{tpu_custom_call.1} parent=47 // pred_region
          %292 = dma.done %s285, 512
        $region52: #{tpu_custom_call.1} parent=47 // pred_fallthru
          _
        // Predicated region
        $region53: #{tpu_custom_call.1} parent=47 // pred_check
          %p293 = pneg %p68
        $region54: #{tpu_custom_call.1} parent=47 // pred_check_branch
          %295 = sbr.rel (%p293) target = $region56
        $region55: #{tpu_custom_call.1} parent=47 // pred_region
          %296 = dma.done [#allocation7], 512
        $region56: #{tpu_custom_call.1} parent=47 // pred_fallthru
          _
        // Predicated region
        $region57: #{tpu_custom_call.1} parent=47 // pred_check
          %p297 = pneg %p152
        $region58: #{tpu_custom_call.1} parent=47 // pred_check_branch
          %299 = sbr.rel (%p297) target = $region60
        $region59: #{tpu_custom_call.1} parent=47 // pred_region
          %300 = dma.done [#allocation7], 512
        $region60: #{tpu_custom_call.1} parent=47 // pred_fallthru
          _
        %s301 = sand.u32 %s34, 1
        %s302 = scalar_lea.sflag [#allocation4], %s301
        %s303 = sand.u32 %s34, 1
        %s304 = smul.addr %s303, 32
        %s305 = scalar_lea.vmem [#allocation3], %s304
        %p306 = pneg %p47
        %p307 = pneg %p44
        %p308 = pneg %p68
        %p309 = pneg %p65
        %p310 = pneg %p89
        %p311 = pneg %p86
        %p312 = pneg %p110
        %p313 = pneg %p107
        %p314 = pneg %p131
        %p315 = pneg %p128
        %p316 = pneg %p152
        %p317 = pneg %p149
        %p318 = pneg %p173
        %p319 = pneg %p170
        %p320 = pneg %p199
        %p321 = pneg %p196
        %s322 = sand.u32 %s186, 1
        %s323 = scalar_lea.sflag [#allocation5], %s322
        %s324 = sand.u32 %s186, 1
        %s325 = smul.addr %s324, 8
        %s326 = scalar_lea.vmem [#allocation9], %s325
        %s327 = smul.u32 8, %s26
        %v328 = vld [vmem:[%s288] sm:$0xf]
        %v329 = vld [vmem:[%s288 + $0x4] sm:$0xf]
        %v330 = vld [vmem:[%s288 + $0x8] sm:$0xf]
        %v331 = vld [vmem:[%s288 + $0xc] sm:$0xf]
        %v332 = vld [vmem:[%s288 + $0x10] sm:$0xf]
        %v333 = vld [vmem:[%s288 + $0x14] sm:$0xf]
        %v334 = vld [vmem:[%s288 + $0x18] sm:$0xf]
        %v335 = vld [vmem:[%s288 + $0x1c] sm:$0xf]
        %v336 = vunpack.c.l.bf16 %v328
        %v337 = vunpack.c.l.bf16 %v329
        %v338 = vunpack.c.l.bf16 %v330
        %v339 = vunpack.c.l.bf16 %v331
        %v340 = vunpack.c.l.bf16 %v332
        %v341 = vunpack.c.l.bf16 %v333
        %v342 = vunpack.c.l.bf16 %v334
        %v343 = vunpack.c.l.bf16 %v335
        %v344 = vld [vmem:[#allocation6] sm:$0xff]
        %v345 = vld [vmem:[#allocation6 + $0x8] sm:$0xff]
        %v346 = vld [vmem:[#allocation6 + $0x10] sm:$0xff]
        %v347 = vld [vmem:[#allocation6 + $0x18] sm:$0xff]
        %v348 = vld [vmem:[%s2] sm:$0x1]
        %v350 = vlaneseq
        %v351 = vshrl.u32 %v350, 7
        %v352 = vsub.s32 0, %v351
        %v353 = vrot.slane %v348, %v352
        %vm355 = vcmask 261120
        %v357 = vsel %vm355, %v336, 0
        %v360 = vsel %vm355, %v337, 0
        %v363 = vsel %vm355, %v338, 0
        %v366 = vsel %vm355, %v339, 0
        %v369 = vsel %vm355, %v340, 0
        %v372 = vsel %vm355, %v341, 0
        %v375 = vsel %vm355, %v342, 0
        %v378 = vsel %vm355, %v343, 0
        %380 = vmatprep.subr.mxu0 0.0
        %381 = vmatpush1.msra.mxu0 0.0
        %382 = vmatprep.subr.mxu0 0.0
        %383 = vmatpush1.msra.mxu0 0.0
        %384 = vmatprep.subr.mxu0 0.0
        %385 = vmatpush1.msra.mxu0 0.0
        %386 = vmatprep.subr.mxu0 0.0
        %387 = vmatpush1.msra.mxu0 0.0
        %388 = vmatprep.subr.mxu0 0.0
        %389 = vmatpush1.msra.mxu0 0.0
        %390 = vmatprep.subr.mxu0 0.0
        %391 = vmatpush1.msra.mxu0 0.0
        %392 = vmatprep.subr.mxu0 0.0
        %393 = vmatpush1.msra.mxu0 0.0
        %394 = vmatprep.subr.mxu0 0.0
        %395 = vmatpush1.msra.mxu0 0.0
        %396 = vmatprep.subr.mxu0 0.0
        %397 = vmatpush1.msra.mxu0 0.0
        %398 = vmatprep.subr.mxu0 0.0
        %399 = vmatpush1.msra.mxu0 0.0
        %400 = vmatprep.subr.mxu0 0.0
        %401 = vmatpush1.msra.mxu0 0.0
        %402 = vmatprep.subr.mxu0 0.0
        %403 = vmatpush1.msra.mxu0 0.0
        %404 = vmatprep.subr.mxu0 0.0
        %405 = vmatpush1.msra.mxu0 %v347
        %406 = vmatprep.subr.mxu0 0.0
        %407 = vmatpush1.msra.mxu0 %v346
        %408 = vmatprep.subr.mxu0 0.0
        %409 = vmatpush1.msra.mxu0 %v345
        %410 = vmatprep.subr.mxu0 0.0
        %411 = vmatpush1.msra.mxu0 %v344
        %412 = vmatprep.subr.mxu0 0.0
        %413 = vmatpush2.msra.mxu0 0.0
        %414 = vmatprep.subr.mxu0 0.0
        %415 = vmatpush2.msra.mxu0 0.0
        %416 = vmatprep.subr.mxu0 0.0
        %417 = vmatpush2.msra.mxu0 0.0
        %418 = vmatprep.subr.mxu0 0.0
        %419 = vmatpush2.msra.mxu0 0.0
        %420 = vmatprep.subr.mxu0 0.0
        %421 = vmatpush2.msra.mxu0 0.0
        %422 = vmatprep.subr.mxu0 0.0
        %423 = vmatpush2.msra.mxu0 0.0
        %424 = vmatprep.subr.mxu0 0.0
        %425 = vmatpush2.msra.mxu0 0.0
        %426 = vmatprep.subr.mxu0 0.0
        %427 = vmatpush2.msra.mxu0 0.0
        %428 = vmatprep.subr.mxu0 0.0
        %429 = vmatpush2.msra.mxu0 0.0
        %430 = vmatprep.subr.mxu0 0.0
        %431 = vmatpush2.msra.mxu0 0.0
        %432 = vmatprep.subr.mxu0 0.0
        %433 = vmatpush2.msra.mxu0 0.0
        %434 = vmatprep.subr.mxu0 0.0
        %435 = vmatpush2.msra.mxu0 0.0
        %436 = vmatprep.subr.mxu0 0.0
        %437 = vmatpush2.msra.mxu0 0.0
        %438 = vmatprep.subr.mxu0 0.0
        %439 = vmatpush2.msra.mxu0 0.0
        %440 = vmatprep.subr.mxu0 0.0
        %441 = vmatpush2.msra.mxu0 0.0
        %442 = vmatprep.subr.mxu0 0.0
        %443 = vmatpush2.msra.mxu0 0.0
        %444 = vmatprep.mubr.f32.mxu0 0.0
        %445 = vmatmul.mubr.f32.gmra.mxu0 %v357
        %v446 = vpop.f32.mrf.mxu0
        %v447 = vadd.f32 %v353, %v446
        %v448 = vpop.f32.mrf.mxu0
        %449 = vmatprep.mubr.f32.mxu0 0.0
        %450 = vmatmul.mubr.f32.gmra.mxu0 %v360
        %v451 = vpop.f32.mrf.mxu0
        %v452 = vadd.f32 %v353, %v451
        %v453 = vpop.f32.mrf.mxu0
        %454 = vmatprep.mubr.f32.mxu0 0.0
        %455 = vmatmul.mubr.f32.gmra.mxu0 %v363
        %v456 = vpop.f32.mrf.mxu0
        %v457 = vadd.f32 %v353, %v456
        %v458 = vpop.f32.mrf.mxu0
        %459 = vmatprep.mubr.f32.mxu0 0.0
        %460 = vmatmul.mubr.f32.gmra.mxu0 %v366
        %v461 = vpop.f32.mrf.mxu0
        %v462 = vadd.f32 %v353, %v461
        %v463 = vpop.f32.mrf.mxu0
        %464 = vmatprep.mubr.f32.mxu0 0.0
        %465 = vmatmul.mubr.f32.gmra.mxu0 %v369
        %v466 = vpop.f32.mrf.mxu0
        %v467 = vadd.f32 %v353, %v466
        %v468 = vpop.f32.mrf.mxu0
        %469 = vmatprep.mubr.f32.mxu0 0.0
        %470 = vmatmul.mubr.f32.gmra.mxu0 %v372
        %v471 = vpop.f32.mrf.mxu0
        %v472 = vadd.f32 %v353, %v471
        %v473 = vpop.f32.mrf.mxu0
        %474 = vmatprep.mubr.f32.mxu0 0.0
        %475 = vmatmul.mubr.f32.gmra.mxu0 %v375
        %v476 = vpop.f32.mrf.mxu0
        %v477 = vadd.f32 %v353, %v476
        %v478 = vpop.f32.mrf.mxu0
        %479 = vmatprep.mubr.f32.mxu0 0.0
        %480 = vmatmul.mubr.f32.gmra.mxu0 %v378
        %v481 = vpop.f32.mrf.mxu0
        %v482 = vadd.f32 %v353, %v481
        %v483 = vpop.f32.mrf.mxu0
        %484 = vdwg.mxu0
        %v485 = vtanh.pop %v447
        %v486 = vtanh.pop %v452
        %v487 = vtanh.pop %v457
        %v488 = vtanh.pop %v462
        %v489 = vtanh.pop %v467
        %v490 = vtanh.pop %v472
        %v491 = vtanh.pop %v477
        %v492 = vtanh.pop %v482
        %s493 = sld [smem:[#allocation2]]
        %v494 = vld [vmem:[%s3] sm:$0x1]
        %v496 = vlaneseq
        %v497 = vshrl.u32 %v496, 7
        %v498 = vsub.s32 0, %v497
        %v499 = vrot.slane %v494, %v498
        %v501 = vmul.f32 %v485, %v499
        %v502 = vmul.f32 %v486, %v499
        %v503 = vmul.f32 %v487, %v499
        %v504 = vmul.f32 %v488, %v499
        %v505 = vmul.f32 %v489, %v499
        %v506 = vmul.f32 %v490, %v499
        %v507 = vmul.f32 %v491, %v499
        %v508 = vmul.f32 %v492, %v499
        %509 = vadd.xlane.f32.xlu0 %v501
        %v510 = vpop.xlane.xlu0 %509
        %511 = vadd.xlane.f32.xlu0 %v502
        %v512 = vpop.xlane.xlu0 %511
        %513 = vadd.xlane.f32.xlu0 %v503
        %v514 = vpop.xlane.xlu0 %513
        %515 = vadd.xlane.f32.xlu0 %v504
        %v516 = vpop.xlane.xlu0 %515
        %517 = vadd.xlane.f32.xlu0 %v505
        %v518 = vpop.xlane.xlu0 %517
        %519 = vadd.xlane.f32.xlu0 %v506
        %v520 = vpop.xlane.xlu0 %519
        %521 = vadd.xlane.f32.xlu0 %v507
        %v522 = vpop.xlane.xlu0 %521
        %523 = vadd.xlane.f32.xlu0 %v508
        %v524 = vpop.xlane.xlu0 %523
        %v525 = vstv %s493
        %v526 = vadd.f32 %v510, %v525
        %v527 = vadd.f32 %v512, %v525
        %v528 = vadd.f32 %v514, %v525
        %v529 = vadd.f32 %v516, %v525
        %v530 = vadd.f32 %v518, %v525
        %v531 = vadd.f32 %v520, %v525
        %v532 = vadd.f32 %v522, %v525
        %v533 = vadd.f32 %v524, %v525
        %v534 = vmul.f32 %v526, 1.442695
        %v535 = vpow.pop %v534
        %v536 = vmul.f32 %v527, 1.442695
        %v537 = vpow.pop %v536
        %v538 = vmul.f32 %v528, 1.442695
        %v539 = vpow.pop %v538
        %v540 = vmul.f32 %v529, 1.442695
        %v541 = vpow.pop %v540
        %v542 = vmul.f32 %v530, 1.442695
        %v543 = vpow.pop %v542
        %v544 = vmul.f32 %v531, 1.442695
        %v545 = vpow.pop %v544
        %v546 = vmul.f32 %v532, 1.442695
        %v547 = vpow.pop %v546
        %v548 = vmul.f32 %v533, 1.442695
        %v549 = vpow.pop %v548
        %v550 = vrot.slane %v535, 4
        %v551 = vadd.f32 %v535, %v550
        %v552 = vrot.slane %v551, 2
        %v553 = vadd.f32 %v551, %v552
        %v554 = vrot.slane %v553, 1
        %v555 = vadd.f32 %v553, %v554
        %v556 = vrot.slane %v537, 4
        %v557 = vadd.f32 %v537, %v556
        %v558 = vrot.slane %v557, 2
        %v559 = vadd.f32 %v557, %v558
        %v560 = vrot.slane %v559, 1
        %v561 = vadd.f32 %v559, %v560
        %v562 = vrot.slane %v539, 4
        %v563 = vadd.f32 %v539, %v562
        %v564 = vrot.slane %v563, 2
        %v565 = vadd.f32 %v563, %v564
        %v566 = vrot.slane %v565, 1
        %v567 = vadd.f32 %v565, %v566
        %v568 = vrot.slane %v541, 4
        %v569 = vadd.f32 %v541, %v568
        %v570 = vrot.slane %v569, 2
        %v571 = vadd.f32 %v569, %v570
        %v572 = vrot.slane %v571, 1
        %v573 = vadd.f32 %v571, %v572
        %v574 = vrot.slane %v543, 4
        %v575 = vadd.f32 %v543, %v574
        %v576 = vrot.slane %v575, 2
        %v577 = vadd.f32 %v575, %v576
        %v578 = vrot.slane %v577, 1
        %v579 = vadd.f32 %v577, %v578
        %v580 = vrot.slane %v545, 4
        %v581 = vadd.f32 %v545, %v580
        %v582 = vrot.slane %v581, 2
        %v583 = vadd.f32 %v581, %v582
        %v584 = vrot.slane %v583, 1
        %v585 = vadd.f32 %v583, %v584
        %v586 = vrot.slane %v547, 4
        %v587 = vadd.f32 %v547, %v586
        %v588 = vrot.slane %v587, 2
        %v589 = vadd.f32 %v587, %v588
        %v590 = vrot.slane %v589, 1
        %v591 = vadd.f32 %v589, %v590
        %v592 = vrot.slane %v549, 4
        %v593 = vadd.f32 %v549, %v592
        %v594 = vrot.slane %v593, 2
        %v595 = vadd.f32 %v593, %v594
        %v596 = vrot.slane %v595, 1
        %v597 = vadd.f32 %v595, %v596
        %v598 = vadd.f32 %v555, 1e-08
        %v599 = vadd.f32 %v561, 1e-08
        %v600 = vadd.f32 %v567, 1e-08
        %v601 = vadd.f32 %v573, 1e-08
        %v602 = vadd.f32 %v579, 1e-08
        %v603 = vadd.f32 %v585, 1e-08
        %v604 = vadd.f32 %v591, 1e-08
        %v605 = vadd.f32 %v597, 1e-08
        %v606 = vrcp.pop %v598
        %v607 = vmul.f32 %v535, %v606
        %v608 = vrcp.pop %v599
        %v609 = vmul.f32 %v537, %v608
        %v610 = vrcp.pop %v600
        %v611 = vmul.f32 %v539, %v610
        %v612 = vrcp.pop %v601
        %v613 = vmul.f32 %v541, %v612
        %v614 = vrcp.pop %v602
        %v615 = vmul.f32 %v543, %v614
        %v616 = vrcp.pop %v603
        %v617 = vmul.f32 %v545, %v616
        %v618 = vrcp.pop %v604
        %v619 = vmul.f32 %v547, %v618
        %v620 = vrcp.pop %v605
        %v621 = vmul.f32 %v549, %v620
        %v622 = vmul.f32 %v336, %v607
        %v623 = vmul.f32 %v337, %v609
        %v624 = vmul.f32 %v338, %v611
        %v625 = vmul.f32 %v339, %v613
        %v626 = vmul.f32 %v340, %v615
        %v627 = vmul.f32 %v341, %v617
        %v628 = vmul.f32 %v342, %v619
        %v629 = vmul.f32 %v343, %v621
        %v630 = vsel %vm355, %v622, 0.0
        %v631 = vrot.slane %v630, 4
        %v632 = vadd.f32 %v630, %v631
        %v633 = vrot.slane %v632, 2
        %v634 = vadd.f32 %v632, %v633
        %v635 = vrot.slane %v634, 1
        %v636 = vadd.f32 %v634, %v635
        %v637 = vsel %vm355, %v623, 0.0
        %v638 = vrot.slane %v637, 4
        %v639 = vadd.f32 %v637, %v638
        %v640 = vrot.slane %v639, 2
        %v641 = vadd.f32 %v639, %v640
        %v642 = vrot.slane %v641, 1
        %v643 = vadd.f32 %v641, %v642
        %v644 = vsel %vm355, %v624, 0.0
        %v645 = vrot.slane %v644, 4
        %v646 = vadd.f32 %v644, %v645
        %v647 = vrot.slane %v646, 2
        %v648 = vadd.f32 %v646, %v647
        %v649 = vrot.slane %v648, 1
        %v650 = vadd.f32 %v648, %v649
        %v651 = vsel %vm355, %v625, 0.0
        %v652 = vrot.slane %v651, 4
        %v653 = vadd.f32 %v651, %v652
        %v654 = vrot.slane %v653, 2
        %v655 = vadd.f32 %v653, %v654
        %v656 = vrot.slane %v655, 1
        %v657 = vadd.f32 %v655, %v656
        %v658 = vsel %vm355, %v626, 0.0
        %v659 = vrot.slane %v658, 4
        %v660 = vadd.f32 %v658, %v659
        %v661 = vrot.slane %v660, 2
        %v662 = vadd.f32 %v660, %v661
        %v663 = vrot.slane %v662, 1
        %v664 = vadd.f32 %v662, %v663
        %v665 = vsel %vm355, %v627, 0.0
        %v666 = vrot.slane %v665, 4
        %v667 = vadd.f32 %v665, %v666
        %v668 = vrot.slane %v667, 2
        %v669 = vadd.f32 %v667, %v668
        %v670 = vrot.slane %v669, 1
        %v671 = vadd.f32 %v669, %v670
        %v672 = vsel %vm355, %v628, 0.0
        %v673 = vrot.slane %v672, 4
        %v674 = vadd.f32 %v672, %v673
        %v675 = vrot.slane %v674, 2
        %v676 = vadd.f32 %v674, %v675
        %v677 = vrot.slane %v676, 1
        %v678 = vadd.f32 %v676, %v677
        %v679 = vsel %vm355, %v629, 0.0
        %v680 = vrot.slane %v679, 4
        %v681 = vadd.f32 %v679, %v680
        %v682 = vrot.slane %v681, 2
        %v683 = vadd.f32 %v681, %v682
        %v684 = vrot.slane %v683, 1
        %v685 = vadd.f32 %v683, %v684
        %v686 = vld [vmem:[#allocation8] sm:$0xff]
        %v687 = vld [vmem:[#allocation8 + $0x8] sm:$0xff]
        %v688 = vld [vmem:[#allocation8 + $0x10] sm:$0xff]
        %v689 = vld [vmem:[#allocation8 + $0x18] sm:$0xff]
        %v690 = vld [vmem:[%s6] sm:$0x1]
        %v692 = vlaneseq
        %v693 = vshrl.u32 %v692, 7
        %v694 = vsub.s32 0, %v693
        %v695 = vrot.slane %v690, %v694
        %vm705 = vcmask 1041409
        %v706 = vsel %vm705, %v643, %v636
        %vm707 = vcmask 1042434
        %v708 = vsel %vm707, %v650, %v706
        %vm709 = vcmask 1043459
        %v710 = vsel %vm709, %v657, %v708
        %vm711 = vcmask 1044484
        %v712 = vsel %vm711, %v664, %v710
        %vm713 = vcmask 1045509
        %v714 = vsel %vm713, %v671, %v712
        %vm715 = vcmask 1046534
        %v716 = vsel %vm715, %v678, %v714
        %vm717 = vcmask 1047559
        %v718 = vsel %vm717, %v685, %v716
        %v719 = vsel %vm355, %v718, 0
        %721 = vmatprep.subr.mxu0 0.0
        %722 = vmatpush1.msra.mxu0 0.0
        %723 = vmatprep.subr.mxu0 0.0
        %724 = vmatpush1.msra.mxu0 0.0
        %725 = vmatprep.subr.mxu0 0.0
        %726 = vmatpush1.msra.mxu0 0.0
        %727 = vmatprep.subr.mxu0 0.0
        %728 = vmatpush1.msra.mxu0 0.0
        %729 = vmatprep.subr.mxu0 0.0
        %730 = vmatpush1.msra.mxu0 0.0
        %731 = vmatprep.subr.mxu0 0.0
        %732 = vmatpush1.msra.mxu0 0.0
        %733 = vmatprep.subr.mxu0 0.0
        %734 = vmatpush1.msra.mxu0 0.0
        %735 = vmatprep.subr.mxu0 0.0
        %736 = vmatpush1.msra.mxu0 0.0
        %737 = vmatprep.subr.mxu0 0.0
        %738 = vmatpush1.msra.mxu0 0.0
        %739 = vmatprep.subr.mxu0 0.0
        %740 = vmatpush1.msra.mxu0 0.0
        %741 = vmatprep.subr.mxu0 0.0
        %742 = vmatpush1.msra.mxu0 0.0
        %743 = vmatprep.subr.mxu0 0.0
        %744 = vmatpush1.msra.mxu0 0.0
        %745 = vmatprep.subr.mxu0 0.0
        %746 = vmatpush1.msra.mxu0 %v689
        %747 = vmatprep.subr.mxu0 0.0
        %748 = vmatpush1.msra.mxu0 %v688
        %749 = vmatprep.subr.mxu0 0.0
        %750 = vmatpush1.msra.mxu0 %v687
        %751 = vmatprep.subr.mxu0 0.0
        %752 = vmatpush1.msra.mxu0 %v686
        %753 = vmatprep.subr.mxu0 0.0
        %754 = vmatpush2.msra.mxu0 0.0
        %755 = vmatprep.subr.mxu0 0.0
        %756 = vmatpush2.msra.mxu0 0.0
        %757 = vmatprep.subr.mxu0 0.0
        %758 = vmatpush2.msra.mxu0 0.0
        %759 = vmatprep.subr.mxu0 0.0
        %760 = vmatpush2.msra.mxu0 0.0
        %761 = vmatprep.subr.mxu0 0.0
        %762 = vmatpush2.msra.mxu0 0.0
        %763 = vmatprep.subr.mxu0 0.0
        %764 = vmatpush2.msra.mxu0 0.0
        %765 = vmatprep.subr.mxu0 0.0
        %766 = vmatpush2.msra.mxu0 0.0
        %767 = vmatprep.subr.mxu0 0.0
        %768 = vmatpush2.msra.mxu0 0.0
        %769 = vmatprep.subr.mxu0 0.0
        %770 = vmatpush2.msra.mxu0 0.0
        %771 = vmatprep.subr.mxu0 0.0
        %772 = vmatpush2.msra.mxu0 0.0
        %773 = vmatprep.subr.mxu0 0.0
        %774 = vmatpush2.msra.mxu0 0.0
        %775 = vmatprep.subr.mxu0 0.0
        %776 = vmatpush2.msra.mxu0 0.0
        %777 = vmatprep.subr.mxu0 0.0
        %778 = vmatpush2.msra.mxu0 0.0
        %779 = vmatprep.subr.mxu0 0.0
        %780 = vmatpush2.msra.mxu0 0.0
        %781 = vmatprep.subr.mxu0 0.0
        %782 = vmatpush2.msra.mxu0 0.0
        %783 = vmatprep.subr.mxu0 0.0
        %784 = vmatpush2.msra.mxu0 0.0
        %785 = vmatprep.mubr.f32.mxu0 0.0
        %786 = vmatmul.mubr.f32.gmra.mxu0 %v719
        %v787 = vpop.f32.mrf.mxu0
        %v788 = vadd.f32 %v695, %v787
        %v789 = vpop.f32.mrf.mxu0
        %790 = vdwg.mxu0
        %791 = vst [vmem:[%s326] sm:$0xff] %v788
        %s792 = sand.u32 %s186, 1
        %s793 = scalar_lea.sflag [#allocation5], %s792
        %s794 = sand.u32 %s186, 1
        %s795 = smul.addr %s794, 8
        %s796 = scalar_lea.vmem [#allocation9], %s795
        // Predicated region
        $region61: #{tpu_custom_call.1} parent=47 // pred_check
          %p797 = pneg %p196
        $region62: #{tpu_custom_call.1} parent=47 // pred_check_branch
          %799 = sbr.rel (%p797) target = $region64
        $region63: #{tpu_custom_call.1} parent=47 // pred_region
          %s801 = ssub.s32 128, 128
          %802 = vsyncadd %s793, %s801
          %s803 = smul.addr %s26, 128
          %s804 = scalar_lea.hbm %s7, %s803
          %s806 = sshll.u32 %s796, 4
          %s807 = int_to_ptr.vmem [resolvable:$true] %s806
          %809 = dma.vmem_to_hbm [thread:$0]  %s807, 128, %s804, %s793
        $region64: #{tpu_custom_call.1} parent=47 // pred_fallthru
          _
      $region48: #{tpu_custom_call.1} parent=5 // pred_fallthru
        _
      %p810 = scmp.le.s32.totalorder 2, %s21
      // Predicated region
      $region65: #{tpu_custom_call.1} parent=5 // pred_check
        %p811 = pneg %p810
      $region66: #{tpu_custom_call.1} parent=5 // pred_check_branch
        %813 = sbr.rel (%p811) target = $region68
      $region67: #{tpu_custom_call.1} parent=5 // pred_region
        %s814 = ssub.s32 %s21, 2
        // Predicated region
        $region69: #{tpu_custom_call.1} parent=67 // pred_check
          %p815 = pneg %p202
        $region70: #{tpu_custom_call.1} parent=67 // pred_check_branch
          %817 = sbr.rel (%p815) target = $region72
        $region71: #{tpu_custom_call.1} parent=67 // pred_region
          %s818 = sand.u32 %s187, 1
          %s819 = scalar_lea.sflag [#allocation5], %s818
          %s820 = sand.u32 %s187, 1
          %s821 = smul.addr %s820, 8
          %s822 = scalar_lea.vmem [#allocation9], %s821
          %823 = dma.done %s819, 128
        $region72: #{tpu_custom_call.1} parent=67 // pred_fallthru
          _
      $region68: #{tpu_custom_call.1} parent=5 // pred_fallthru
        _
    $region6: #{tpu_custom_call.1} parent=1 // loop_footer
      %s25 = sadd.s32 1, %s21
    $region7: #{tpu_custom_call.1} parent=1 // loop_footer_branch
      %20 = sbr.rel target = $region3
    $region8: #{tpu_custom_call.1} parent=1 // loop_exit
      _
    %824 = vsyncpa [#allocation4], 1
    %s825 = scalar_lea.sflag [#allocation4], 1
    %826 = vsyncpa %s825, 1
    %827 = vsyncpa [#allocation7], 1
    %828 = vsyncpa [#allocation5], 1
    %s829 = scalar_lea.sflag [#allocation5], 1
    %830 = vsyncpa %s829, 1

</llo_original>
